<compile_context>
chip_gen: v5e
topology: v5e:2x2
jax: 0.10.0
libtpu: 0.0.40
codegen_flags: <defaults>
</compile_context>

<pallas_src>
import functools

import jax
import jax.numpy as jnp
from jax import lax
from jax.experimental import pallas as pl
from jax.experimental.pallas import tpu as pltpu

LANES = 128


def _round_up(a, b):
    return (a + b - 1) // b * b


def _vmem_budget():
    """Return (vmem_limit_bytes, target_block_bytes) from the real chip budget."""
    try:
        phys = int(pltpu.get_tpu_info().vmem_capacity_bytes)
    except Exception:
        phys = 64 * 1024 * 1024  # conservative fallback: v7x has 64 MiB / TensorCore
    limit = min(phys * 3 // 4, 100 * 1024 * 1024)   # v7x -> 48 MiB, v5e/v6e -> ~96 MiB
    # Apply pass holds ~4 live blocks (2x in + 2x out, double buffered) + tiny scale/shift.
    target = max(512 * 1024, limit // 6)
    return limit, target


def _pick_tiles(N, C, M, itemsize, target_bytes):
    """Pick (nb, tm): batch rows per block and lane tile (multiple of 128)."""
    m_pad = _round_up(M, LANES)
    row_bytes = max(1, C * itemsize)
    tm = min(m_pad, max(LANES, (target_bytes // row_bytes) // LANES * LANES))
    block_bytes = C * tm * itemsize
    nb_cap = max(1, int(target_bytes // block_bytes))
    nb = 1
    for d in range(min(N, nb_cap), 0, -1):   # largest divisor of N under the cap
        if N % d == 0:
            nb = d
            break
    return nb, tm


# ------------------------- fused single-pass path -------------------------

def _fused_kernel(x_ref, gamma_ref, beta_ref, o_ref, *, eps):
    # Whole activation resident in VMEM: centered (two-sweep) variance for free.
    x = x_ref[...].astype(jnp.float32)                     # (N, C, M)
    inv_count = 1.0 / (x.shape[0] * x.shape[2])
    sb = jnp.sum(x, axis=0)                                # (C, M) batch fold (VPU adds)
    mean = (jnp.sum(sb, axis=1, keepdims=True) * inv_count)[None]     # (1, C, 1)
    xc = x - mean
    qb = jnp.sum(xc * xc, axis=0)                          # (C, M)
    var = (jnp.sum(qb, axis=1, keepdims=True) * inv_count)[None]      # (1, C, 1)
    inv_std = lax.rsqrt(var + eps)                         # EUP, C ops total
    g = gamma_ref[...].astype(jnp.float32)                 # (1, C, 1)
    b = beta_ref[...].astype(jnp.float32)
    o_ref[...] = (xc * (g * inv_std) + b).astype(o_ref.dtype)


# ------------------------- two-pass streaming path -------------------------

def _stats_kernel(x_ref, psum_ref, psq_ref, *, m_total, tm):
    # x_ref: (Nb, C, TM); psum/psq: (1, C, 1) per-batch-block partial accumulators,
    # resident across the m (reduction) axis, emitted per n block (megacore parallel).
    m = pl.program_id(1)
    m_last = pl.num_programs(1) - 1

    @pl.when(m == 0)
    def _init():
        psum_ref[...] = jnp.zeros_like(psum_ref)
        psq_ref[...] = jnp.zeros_like(psq_ref)

    x = x_ref[...].astype(jnp.float32)                     # (Nb, C, TM)

    def _accum(xv):
        sb = jnp.sum(xv, axis=0)                           # (C, TM) batch fold
        qb = jnp.sum(xv * xv, axis=0)                      # (C, TM)
        # TODO(synk): for v7x a (C, 128) lane-partial accumulator (deferring the
        # cross-lane XLU reduce to finalize) would trim per-tile vector work further.
        psum_ref[...] += jnp.sum(sb, axis=1, keepdims=True)[None]
        psq_ref[...] += jnp.sum(qb, axis=1, keepdims=True)[None]

    if m_total % tm != 0:
        # Mask only the ragged last spatial tile.
        @pl.when(m != m_last)
        def _full():
            _accum(x)

        @pl.when(m == m_last)
        def _ragged():
            lane = lax.broadcasted_iota(jnp.int32, x.shape, 2)
            valid = (m * tm + lane) < m_total
            _accum(jnp.where(valid, x, 0.0))
    else:
        _accum(x)


def _apply_kernel(x_ref, scale_ref, shift_ref, o_ref):
    # out = x * scale + shift (per-channel scale/shift broadcast over batch & lanes).
    x = x_ref[...].astype(jnp.float32)                     # (Nb, C, TM)
    o_ref[...] = (x * scale_ref[...] + shift_ref[...]).astype(o_ref.dtype)


# ------------------------------- wrapper -------------------------------

def batch_layer(x, gamma, beta, *, eps=1e-5, force_two_pass=False):
    """x: (N, C, H, W); gamma, beta: (1, C, 1, 1)."""
    N, C, H, W = x.shape
    M = H * W

    # Free, contiguous reshapes -- no HBM transposes.
    x3 = x.reshape(N, C, M)
    g3 = gamma.reshape(1, C, 1).astype(jnp.float32)
    b3 = beta.reshape(1, C, 1).astype(jnp.float32)

    vmem_limit, target_bytes = _vmem_budget()
    in_bytes = x3.size * x3.dtype.itemsize
    f32_bytes = x3.size * 4
    fused_vmem = 2 * in_bytes + 2 * f32_bytes              # in + out + f32 temps (approx)

    if (not force_two_pass) and fused_vmem <= vmem_limit // 2:
        # ---- Fused path: 1 HBM read + 1 write. ----
        out3 = pl.pallas_call(
            functools.partial(_fused_kernel, eps=eps),
            out_shape=jax.ShapeDtypeStruct((N, C, M), x.dtype),
            compiler_params=pltpu.CompilerParams(vmem_limit_bytes=vmem_limit),
        )(x3, g3, b3)
        return out3.reshape(N, C, H, W)

    # ---- Two-pass streaming path. ----
    nb, tm = _pick_tiles(N, C, M, x3.dtype.itemsize, target_bytes)
    n_blocks = N // nb
    m_tiles = pl.cdiv(M, tm)
    grid = (n_blocks, m_tiles)
    x_spec = pl.BlockSpec((nb, C, tm), lambda n, m: (n, 0, m))

    # Pass 1: per-batch-block partial per-channel (sum, sumsq).
    psum, psq = pl.pallas_call(
        functools.partial(_stats_kernel, m_total=M, tm=tm),
        out_shape=(jax.ShapeDtypeStruct((n_blocks, C, 1), jnp.float32),
                   jax.ShapeDtypeStruct((n_blocks, C, 1), jnp.float32)),
        grid=grid,
        in_specs=[x_spec],
        out_specs=(pl.BlockSpec((1, C, 1), lambda n, m: (n, 0, 0)),
                   pl.BlockSpec((1, C, 1), lambda n, m: (n, 0, 0))),
        compiler_params=pltpu.CompilerParams(
            dimension_semantics=("parallel", "arbitrary"),
            vmem_limit_bytes=vmem_limit),
    )(x3)

    # Tiny C-element finalize in plain JAX: merge partials, fold gamma/beta.
    # TODO(synk): E[x^2]-mean^2 in f32 can lose precision for very large N*H*W with a
    # large common-mode mean; a Welford-style chunk merge would fix it if needed.
    count = jnp.float32(N * M)
    mean = jnp.sum(psum, axis=0, keepdims=True) / count                      # (1, C, 1)
    var = jnp.maximum(jnp.sum(psq, axis=0, keepdims=True) / count - mean * mean, 0.0)
    inv_std = lax.rsqrt(var + eps)
    scale = g3 * inv_std                                                      # (1, C, 1)
    shift = b3 - mean * scale

    # Pass 2: out = x * scale + shift; both grid axes parallel (megacore friendly).
    out3 = pl.pallas_call(
        _apply_kernel,
        out_shape=jax.ShapeDtypeStruct((N, C, M), x.dtype),
        grid=grid,
        in_specs=[x_spec,
                  pl.BlockSpec((1, C, 1), lambda n, m: (0, 0, 0)),
                  pl.BlockSpec((1, C, 1), lambda n, m: (0, 0, 0))],
        out_specs=pl.BlockSpec((nb, C, tm), lambda n, m: (n, 0, m)),
        compiler_params=pltpu.CompilerParams(
            dimension_semantics=("parallel", "parallel"),
            vmem_limit_bytes=vmem_limit),
    )(x3, scale, shift)

    return out3.reshape(N, C, H, W)


def reference(x, gamma, beta, eps=1e-5):
    mean = jnp.mean(x, axis=(0, 2, 3), keepdims=True)
    a = x - mean
    var = jnp.mean(a * a, axis=(0, 2, 3), keepdims=True)
    return (a / jnp.sqrt(var + eps)) * gamma + beta


if __name__ == "__main__":
    # Small shapes consistent with the module: batch=2, channels=4, spatial=16x16.
    N, C, H, W = 2, 4, 16, 16
    key = jax.random.PRNGKey(0)
    kx, kg, kb = jax.random.split(key, 3)

    x = jax.random.normal(kx, (N, C, H, W), dtype=jnp.float32)
    gamma = jax.random.uniform(kg, (1, C, 1, 1), minval=-0.1, maxval=0.1, dtype=jnp.float32)
    beta = jax.random.uniform(kb, (1, C, 1, 1), minval=-0.1, maxval=0.1, dtype=jnp.float32)

    ref = reference(x, gamma, beta)

    # Fused (VMEM-resident) path -- the one small activations actually take.
    out_fused = jax.block_until_ready(batch_layer(x, gamma, beta))
    assert out_fused.shape == (N, C, H, W)
    assert jnp.allclose(out_fused, ref, atol=1e-5, rtol=1e-5), \
        float(jnp.max(jnp.abs(out_fused - ref)))

    # Two-pass streaming path (forced) -- exercises the large-activation code path.
    out_stream = jax.block_until_ready(batch_layer(x, gamma, beta, force_two_pass=True))
    assert jnp.allclose(out_stream, ref, atol=1e-5, rtol=1e-5), \
        float(jnp.max(jnp.abs(out_stream - ref)))

    print("KERNEL_OK")
</pallas_src>

<mosaic_0001>
module attributes {stable_mosaic.version = 11 : i64} {
  func.func @_fused_kernel(%arg0: memref<2x4x256xf32, #tpu.memory_space<vmem>>, %arg1: memref<1x4x1xf32, #tpu.memory_space<vmem>>, %arg2: memref<1x4x1xf32, #tpu.memory_space<vmem>>, %arg3: memref<2x4x256xf32, #tpu.memory_space<vmem>>) attributes {dimension_semantics = [], scalar_prefetch = 0 : i64, scratch_operands = 0 : i64, tpu.core_type = #tpu.core_type<tc>} {
    %c0 = arith.constant 0 : index
    %c0_0 = arith.constant 0 : index
    %c0_1 = arith.constant 0 : index
    %0 = vector.load %arg0[%c0, %c0_0, %c0_1] : memref<2x4x256xf32, #tpu.memory_space<vmem>>, vector<2x4x256xf32>
    %cst = arith.constant dense<0.000000e+00> : vector<4x256xf32>
    %1 = vector.multi_reduction <add>, %0, %cst [0] : vector<2x4x256xf32> to vector<4x256xf32>
    %cst_2 = arith.constant dense<0.000000e+00> : vector<4xf32>
    %2 = vector.multi_reduction <add>, %1, %cst_2 [1] : vector<4x256xf32> to vector<4xf32>
    %3 = vector.shape_cast %2 : vector<4xf32> to vector<4x1xf32>
    %cst_3 = arith.constant 0.001953125 : f32
    %4 = vector.broadcast %cst_3 : f32 to vector<4x1xf32>
    %5 = arith.mulf %3, %4 : vector<4x1xf32>
    %6 = vector.shape_cast %5 : vector<4x1xf32> to vector<1x4x1xf32>
    %7 = vector.broadcast %6 : vector<1x4x1xf32> to vector<2x4x256xf32>
    %8 = arith.subf %0, %7 : vector<2x4x256xf32>
    %9 = arith.mulf %8, %8 : vector<2x4x256xf32>
    %cst_4 = arith.constant dense<0.000000e+00> : vector<4x256xf32>
    %10 = vector.multi_reduction <add>, %9, %cst_4 [0] : vector<2x4x256xf32> to vector<4x256xf32>
    %cst_5 = arith.constant dense<0.000000e+00> : vector<4xf32>
    %11 = vector.multi_reduction <add>, %10, %cst_5 [1] : vector<4x256xf32> to vector<4xf32>
    %12 = vector.shape_cast %11 : vector<4xf32> to vector<4x1xf32>
    %cst_6 = arith.constant 0.001953125 : f32
    %13 = vector.broadcast %cst_6 : f32 to vector<4x1xf32>
    %14 = arith.mulf %12, %13 : vector<4x1xf32>
    %15 = vector.shape_cast %14 : vector<4x1xf32> to vector<1x4x1xf32>
    %cst_7 = arith.constant 9.99999974E-6 : f32
    %16 = vector.broadcast %cst_7 : f32 to vector<1x4x1xf32>
    %17 = arith.addf %15, %16 : vector<1x4x1xf32>
    %18 = math.rsqrt %17 : vector<1x4x1xf32>
    %c0_8 = arith.constant 0 : index
    %c0_9 = arith.constant 0 : index
    %c0_10 = arith.constant 0 : index
    %19 = vector.load %arg1[%c0_8, %c0_9, %c0_10] : memref<1x4x1xf32, #tpu.memory_space<vmem>>, vector<1x4x1xf32>
    %c0_11 = arith.constant 0 : index
    %c0_12 = arith.constant 0 : index
    %c0_13 = arith.constant 0 : index
    %20 = vector.load %arg2[%c0_11, %c0_12, %c0_13] : memref<1x4x1xf32, #tpu.memory_space<vmem>>, vector<1x4x1xf32>
    %21 = arith.mulf %19, %18 : vector<1x4x1xf32>
    %22 = vector.broadcast %21 : vector<1x4x1xf32> to vector<2x4x256xf32>
    %23 = arith.mulf %8, %22 : vector<2x4x256xf32>
    %24 = vector.broadcast %20 : vector<1x4x1xf32> to vector<2x4x256xf32>
    %25 = arith.addf %23, %24 : vector<2x4x256xf32>
    %c0_14 = arith.constant 0 : index
    %c0_15 = arith.constant 0 : index
    %c0_16 = arith.constant 0 : index
    %26 = vector.load %arg3[%c0_14, %c0_15, %c0_16] : memref<2x4x256xf32, #tpu.memory_space<vmem>>, vector<2x4x256xf32>
    tpu.vector_store %arg3[%c0_14, %c0_15, %c0_16], %25 {strides = array<i32>} : memref<2x4x256xf32, #tpu.memory_space<vmem>>, vector<2x4x256xf32>,
    return
  }
}

</mosaic_0001>

<llo_original>
// kernel: tpu_custom_call.1
$region0: #{tpu_custom_call.1}
  #allocation0 [shape = 'u32[]', space=smem, size = 0x4, offset = 0x4, fixed_abs, tag = 'smem constant byte address 0x4 - core index']
  #allocation1 [shape = 'u32[72,128]{1,0:T(1,128)}', space=vmem, size = 0x9000, scoped, tag = 'internal scratch']
  %s0 = inlined_call_operand.hbm [shape: f32[2,4,256], index: 0, kind: input, shape index: {}]
  %s1 = inlined_call_operand.vmem [shape: f32[1,4,1], index: 1, kind: input, shape index: {}]
  %s2 = inlined_call_operand.vmem [shape: f32[1,4,1], index: 2, kind: input, shape index: {}]
  %s3 = inlined_call_operand.hbm [shape: f32[2,4,256], index: 3, kind: output, shape index: {}]
  %s4 = sld [smem:[#allocation0]]
  $region26: #{tpu_custom_call.1} parent=0
    _
  %s6 = ssub.s32 1, %s4
  %s7 = scalar_select 0, %s6, %s4
  $region1: #{tpu_custom_call.1} parent=0
    #allocation2 [shape = 'u8[8192]{0}', space=vmem, size = 0x2000, scoped, tag = 'input window, operand 0, single buffered']
    #allocation3 [shape = 's32[1]{0}', space=sflag, size = 0x4, scoped, tag = 'scoped memory for tpu_custom_call.1']
    #allocation4 [shape = 's32[1]{0}', space=sflag, size = 0x4, scoped, tag = 'scoped memory for tpu_custom_call.1']
    #allocation5 [shape = 'u8[8192]{0}', space=vmem, size = 0x2000, scoped, tag = 'output window, operand 0, single buffered']
    %8 = vsyncpa [#allocation3], 0
    %9 = vsyncpa [#allocation4], 0
    // Predicated region
    $region2: #{tpu_custom_call.1} parent=1 // pred_check
      _
    $region3: #{tpu_custom_call.1} parent=1 // pred_check_branch
      %11 = sbr.rel (0) target = $region5
    $region4: #{tpu_custom_call.1} parent=1 // pred_region
      %13 = vsyncadd [#allocation3], 0
      %s14 = sshll.u32 %s0, 4
      %s15 = int_to_ptr.hbm [resolvable:$true] %s14
      %s16 = sshll.u32 [#allocation2], 4
      %s17 = int_to_ptr.vmem [resolvable:$true] %s16
      %22 = dma.hbm_to_vmem [thread:$0]  %s15, 256, %s17, [#allocation3], 128, 128, 8
    $region5: #{tpu_custom_call.1} parent=1 // pred_fallthru
      _
    // Predicated region
    $region6: #{tpu_custom_call.1} parent=1 // pred_check
      _
    $region7: #{tpu_custom_call.1} parent=1 // pred_check_branch
      %24 = sbr.rel (0) target = $region9
    $region8: #{tpu_custom_call.1} parent=1 // pred_region
      _
    $region9: #{tpu_custom_call.1} parent=1 // pred_fallthru
      _
    // Predicated region
    $region10: #{tpu_custom_call.1} parent=1 // pred_check
      _
    $region11: #{tpu_custom_call.1} parent=1 // pred_check_branch
      %26 = sbr.rel (0) target = $region13
    $region12: #{tpu_custom_call.1} parent=1 // pred_region
      _
    $region13: #{tpu_custom_call.1} parent=1 // pred_fallthru
      _
    // Predicated region
    $region14: #{tpu_custom_call.1} parent=1 // pred_check
      _
    $region15: #{tpu_custom_call.1} parent=1 // pred_check_branch
      %28 = sbr.rel (0) target = $region17
    $region16: #{tpu_custom_call.1} parent=1 // pred_region
      %30 = dma.done [#allocation3], 256
    $region17: #{tpu_custom_call.1} parent=1 // pred_fallthru
      _
    %v31 = vld [vmem:[#allocation2] sm:$0xff]
    %v32 = vld [vmem:[#allocation2 + $0x8] sm:$0xff]
    %35 = vst [vmem:[#allocation1] ss:$2 sm:$0xff] %v31
    %v36 = vld.sshfl [vmem:[#allocation1] sm:$0xff pattern:$0x75316420]
    %v37 = vld.sshfl [vmem:[#allocation1 + $0x8] sm:$0xff pattern:$0x75316420]
    %s38 = scalar_lea.vmem [#allocation1], 16
    %39 = vst [vmem:[%s38] ss:$2 sm:$0xff] %v32
    %v40 = vld.sshfl [vmem:[#allocation1 + $0x10] sm:$0xff pattern:$0x75316420]
    %v41 = vld.sshfl [vmem:[#allocation1 + $0x18] sm:$0xff pattern:$0x75316420]
    %vm46 = vcmask 1043456
    %v47 = vsel %vm46, %v36, 0.0
    %v48 = vsel %vm46, %v40, 0.0
    %v49 = vadd.f32 %v47, %v48
    %v50 = vsel %vm46, %v37, 0.0
    %v51 = vsel %vm46, %v41, 0.0
    %v52 = vadd.f32 %v50, %v51
    %v53 = vsel %vm46, %v49, 0.0
    %v54 = vsel %vm46, %v52, 0.0
    %v55 = vadd.f32 %v53, %v54
    %56 = vadd.xlane.f32.xlu0 %v55
    %v57 = vpop.xlane.xlu0 %56
    %v58 = vmul.f32 %v57, 0.001953125
    %v61 = vunpack.c.l.s4 839922192
    %v62 = vunpack.c.0.s8 %v61
    %v63 = vperm.slane %v58, %v62
    %v65 = vsub.f32 %v31, %v63
    %v66 = vsub.f32 %v32, %v63
    %v67 = vmul.f32 %v65, %v65
    %v68 = vmul.f32 %v66, %v66
    %71 = vst [vmem:[#allocation1] ss:$2 sm:$0xff] %v67
    %v72 = vld.sshfl [vmem:[#allocation1] sm:$0xff pattern:$0x75316420]
    %v73 = vld.sshfl [vmem:[#allocation1 + $0x8] sm:$0xff pattern:$0x75316420]
    %s74 = scalar_lea.vmem [#allocation1], 16
    %75 = vst [vmem:[%s74] ss:$2 sm:$0xff] %v68
    %v76 = vld.sshfl [vmem:[#allocation1 + $0x10] sm:$0xff pattern:$0x75316420]
    %v77 = vld.sshfl [vmem:[#allocation1 + $0x18] sm:$0xff pattern:$0x75316420]
    %v82 = vsel %vm46, %v72, 0.0
    %v83 = vsel %vm46, %v76, 0.0
    %v84 = vadd.f32 %v82, %v83
    %v85 = vsel %vm46, %v73, 0.0
    %v86 = vsel %vm46, %v77, 0.0
    %v87 = vadd.f32 %v85, %v86
    %v88 = vsel %vm46, %v84, 0.0
    %v89 = vsel %vm46, %v87, 0.0
    %v90 = vadd.f32 %v88, %v89
    %91 = vadd.xlane.f32.xlu0 %v90
    %v92 = vpop.xlane.xlu0 %91
    %v93 = vmul.f32 %v92, 0.001953125
    %v94 = vadd.f32 %v93, 1e-05
    %v95 = vrsqrt.pop %v94
    %v96 = vmul.f32 %v95, %v94
    %v97 = vmul.f32 %v96, %v95
    %v98 = vmul.f32 0.5, %v97
    %v99 = vsub.f32 1.5, %v98
    %v100 = vmul.f32 %v95, %v99
    %vm101 = vweird.f32 %v94
    %vm102 = vweird.f32 %v95
    %vm103 = vmor %vm101, %vm102
    %v104 = vsel %vm103, %v95, %v100
    %v105 = vld [vmem:[%s1] sm:$0xf]
    %v106 = vld [vmem:[%s2] sm:$0xf]
    %v107 = vmul.f32 %v105, %v104
    %109 = vset.pattern.permute.xlu0 0
    %110 = vperm.xlu0 %109, %v107
    %v111 = vpop.permute.xlu0 %110
    %v113 = vunpack.c.l.s4 839922192
    %v114 = vunpack.c.0.s8 %v113
    %v115 = vperm.slane %v111, %v114
    %v117 = vmul.f32 %v65, %v115
    %v118 = vmul.f32 %v66, %v115
    %120 = vset.pattern.permute.xlu0 0
    %121 = vperm.xlu0 %120, %v106
    %v122 = vpop.permute.xlu0 %121
    %v124 = vunpack.c.l.s4 839922192
    %v125 = vunpack.c.0.s8 %v124
    %v126 = vperm.slane %v122, %v125
    %v128 = vadd.f32 %v117, %v126
    %v129 = vadd.f32 %v118, %v126
    %130 = vst [vmem:[#allocation5] sm:$0xff] %v128
    %131 = vst [vmem:[#allocation5 + $0x8] sm:$0xff] %v129
    // Predicated region
    $region18: #{tpu_custom_call.1} parent=1 // pred_check
      _
    $region19: #{tpu_custom_call.1} parent=1 // pred_check_branch
      %133 = sbr.rel (0) target = $region21
    $region20: #{tpu_custom_call.1} parent=1 // pred_region
      %135 = vsyncadd [#allocation4], 0
      %s136 = sshll.u32 [#allocation5], 4
      %s137 = int_to_ptr.vmem [resolvable:$true] %s136
      %s138 = sshll.u32 %s3, 4
      %s139 = int_to_ptr.hbm [resolvable:$true] %s138
      %144 = dma.vmem_to_hbm [thread:$0]  %s137, 256, %s139, [#allocation4], 128, 128, 8
    $region21: #{tpu_custom_call.1} parent=1 // pred_fallthru
      _
    // Predicated region
    $region22: #{tpu_custom_call.1} parent=1 // pred_check
      _
    $region23: #{tpu_custom_call.1} parent=1 // pred_check_branch
      %146 = sbr.rel (0) target = $region25
    $region24: #{tpu_custom_call.1} parent=1 // pred_region
      %148 = dma.done [#allocation4], 256
    $region25: #{tpu_custom_call.1} parent=1 // pred_fallthru
      _
    %149 = vsyncpa [#allocation3], 1
    %150 = vsyncpa [#allocation4], 1

</llo_original>
